<compile_context>
chip_gen: v7x
topology: tpu7x:2x2x1
jax: 0.10.0
libtpu: 0.0.40
codegen_flags: <defaults>
</compile_context>

<pallas_src>
import math

import jax
import jax.numpy as jnp
from jax import lax
from jax.experimental import pallas as pl
from jax.experimental.pallas import tpu as pltpu


def _round_up(v, m):
    return ((v + m - 1) // m) * m


def _gmm_nll_kernel(x_ref, lt_ref, ccol_ref, sel_ref, const_ref, out_ref):
    """One batch tile of the GMM negative log likelihood.

    x_ref:     (TN, D)    tile of samples (rows = samples)
    lt_ref:    (K*D, D)   stacked L_k^T, where L_k L_k^T = cov_inv_k (resident)
    ccol_ref:  (K*D, 1)   stacked L_k^T mu_k (resident)
    sel_ref:   (K, K*D)   -0.5 * per-component block indicator (group-sum + scale, resident)
    const_ref: (K, 1)     -0.5*logdet_k - 0.5*D*log(2*pi) + log(w_k) (resident)
    out_ref:   (1, TN)    lane-dense NLL row for this tile
    """
    x = x_ref[...]                                    # (TN, D) float32

    # y[k*D + j, n] = (L_k^T x_n)_j  -- one stacked MXU matmul (contract over D of both operands,
    # the same pattern as q @ k^T); batch lands on the 128-wide lane axis.
    y = lax.dot_general(
        lt_ref[...], x,
        dimension_numbers=(((1,), (1,)), ((), ())),
        preferred_element_type=jnp.float32)           # (K*D, TN)

    z = y - ccol_ref[...]                             # (K*D, TN): (L_k^T (x_n - mu_k))_j
    sq = z * z

    # quad[k, n] = -0.5 * || L_k^T (x_n - mu_k) ||^2  = -0.5 * (x-mu_k)^T cov_inv_k (x-mu_k)
    quad = jnp.dot(sel_ref[...], sq,
                   preferred_element_type=jnp.float32)  # (K, TN)

    cll = quad + const_ref[...]                       # (K, TN) component log likelihoods + log w

    # stabilized logsumexp over components (sublane axis, K rows)
    m = jnp.max(cll, axis=0, keepdims=True)           # (1, TN)
    s = jnp.sum(jnp.exp(cll - m), axis=0, keepdims=True)
    out_ref[...] = -(m + jnp.log(s))                  # (1, TN), lane-dense store


def gmm_negative_log_likelihood(x, mu, cov_inv, logdet_cov, weights, *, block_n=1024):
    """Pallas TPU implementation of GaussianMixtureModel.forward.

    x:           (N, D) float32
    mu:          (K, D) float32
    cov_inv:     (K, D, D) float32 (as maintained by set_cov)
    logdet_cov:  (K,) float32      (as maintained by set_cov)
    weights:     (K,) float32      (already normalized, sums to 1)
    returns:     (N,) float32  negative log likelihood per sample
    """
    n, d = x.shape
    k = mu.shape[0]

    x = x.astype(jnp.float32)
    mu = mu.astype(jnp.float32)
    cov_inv = cov_inv.astype(jnp.float32)
    logdet_cov = logdet_cov.astype(jnp.float32)
    weights = weights.astype(jnp.float32)

    # ---- parameter prep (plain JAX glue, mirrors set_cov bookkeeping) ----
    # The quadratic form only sees the symmetric part of cov_inv, so symmetrize then factor.
    a_sym = 0.5 * (cov_inv + jnp.swapaxes(cov_inv, -1, -2))
    chol = jnp.linalg.cholesky(a_sym)                         # (K, D, D) lower, L L^T = cov_inv
    lt = jnp.swapaxes(chol, -1, -2)                           # (K, D, D) = L_k^T
    lt_stack = lt.reshape(k * d, d)                           # (K*D, D)
    ccol = jnp.einsum("kij,kj->ki", lt, mu).reshape(k * d, 1)  # (K*D, 1) = stacked L_k^T mu_k
    sel = (-0.5) * jnp.repeat(jnp.eye(k, dtype=jnp.float32), d, axis=1)  # (K, K*D)
    const = (-0.5 * logdet_cov
             - 0.5 * d * jnp.float32(math.log(2.0 * math.pi))
             + jnp.log(weights)).reshape(k, 1)                # (K, 1)

    # ---- choose a lane-aligned batch tile and pad the batch (no divisibility assert) ----
    bn = min(block_n, _round_up(n, 128))
    bn = _round_up(bn, 128)
    n_pad = _round_up(n, bn)
    if n_pad != n:
        x = jnp.pad(x, ((0, n_pad - n), (0, 0)))
    grid = (n_pad // bn,)

    cost = pl.CostEstimate(
        flops=2 * n_pad * d * (k * d) + 2 * n_pad * (k * d) * k,
        transcendentals=n_pad * (k + 1),
        bytes_accessed=4 * (n_pad * d + n_pad + k * d * d + 2 * k * d + 2 * k),
    )

    out = pl.pallas_call(
        _gmm_nll_kernel,
        out_shape=jax.ShapeDtypeStruct((1, n_pad), jnp.float32),
        grid_spec=pltpu.PrefetchScalarGridSpec(
            num_scalar_prefetch=0,
            grid=grid,
            in_specs=[
                pl.BlockSpec((bn, d), lambda i: (i, 0)),        # x tile (streams over the grid)
                pl.BlockSpec((k * d, d), lambda i: (0, 0)),     # L^T stack (resident)
                pl.BlockSpec((k * d, 1), lambda i: (0, 0)),     # L^T mu    (resident)
                pl.BlockSpec((k, k * d), lambda i: (0, 0)),     # selector  (resident)
                pl.BlockSpec((k, 1), lambda i: (0, 0)),         # const     (resident)
            ],
            out_specs=pl.BlockSpec((1, bn), lambda i: (0, i)),  # lane-dense output row
        ),
        compiler_params=pltpu.CompilerParams(
            dimension_semantics=("parallel",),
        ),
        cost_estimate=cost,
    )(x, lt_stack, ccol, sel, const)

    return out[0, :n]


def _reference_nll(x, mu, cov_inv, logdet_cov, weights):
    # Pure-JAX reference mirroring the PyTorch forward() exactly.
    centered = x[None, :, :] - mu[:, None, :]                                   # (K, N, D)
    exponent = jnp.sum(jnp.einsum("knd,kde->kne", centered, cov_inv) * centered, axis=2)  # (K, N)
    d = x.shape[1]
    cll = (-0.5 * logdet_cov[:, None] - 0.5 * exponent
           - 0.5 * d * jnp.log(jnp.float32(2.0 * math.pi)))                      # (K, N)
    cll = cll.T + jnp.log(weights)[None, :]                                      # (N, K)
    return -jax.scipy.special.logsumexp(cll, axis=-1)


if __name__ == "__main__":
    # module hyper-parameters: n_components (K), dimension (D)
    K = 4
    D = 32
    N = 64  # small batch_dimension for the primary check

    key = jax.random.PRNGKey(0)
    kx, kmu, kcov, kx2 = jax.random.split(key, 4)

    # --- deterministic parameter setup (mirrors __init__ + set_cov semantics) ---
    weights = jnp.ones((K,), jnp.float32)
    weights = weights / jnp.sum(weights)                      # set_weights

    mu = 0.5 * jax.random.normal(kmu, (K, D), jnp.float32)    # non-degenerate means

    a = 0.1 * jax.random.normal(kcov, (K, D, D), jnp.float32)
    cov = 0.1 * jnp.eye(D, dtype=jnp.float32)[None] + jnp.einsum("kij,klj->kil", a, a)

    # set_cov: maintain inverse and log-determinant (glue, plain JAX linalg)
    cov_inv = jnp.linalg.inv(cov)
    _, logdet_cov = jnp.linalg.slogdet(cov)
    logdet_cov = logdet_cov.astype(jnp.float32)

    # --- input data (small primary check) ---
    x = jax.random.normal(kx, (N, D), jnp.float32)

    nll = jax.block_until_ready(
        gmm_negative_log_likelihood(x, mu, cov_inv, logdet_cov, weights))
    ref = jax.block_until_ready(_reference_nll(x, mu, cov_inv, logdet_cov, weights))
    assert nll.shape == (N,)
    assert jnp.allclose(nll, ref, rtol=1e-4, atol=1e-3), (
        f"max abs err {jnp.max(jnp.abs(nll - ref))}")

    # --- secondary check: non-divisible batch, multiple grid steps, padding path ---
    N2 = 4099
    x2 = jax.random.normal(kx2, (N2, D), jnp.float32)
    nll2 = jax.block_until_ready(
        gmm_negative_log_likelihood(x2, mu, cov_inv, logdet_cov, weights))
    ref2 = jax.block_until_ready(_reference_nll(x2, mu, cov_inv, logdet_cov, weights))
    assert nll2.shape == (N2,)
    assert jnp.allclose(nll2, ref2, rtol=1e-4, atol=1e-3), (
        f"max abs err {jnp.max(jnp.abs(nll2 - ref2))}")

    print("KERNEL_OK")
</pallas_src>

<mosaic_0001>
module attributes {stable_mosaic.version = 11 : i64} {
  func.func @_gmm_nll_kernel(%arg0: i32, %arg1: memref<128x32xf32, #tpu.memory_space<vmem>>, %arg2: memref<128x32xf32, #tpu.memory_space<vmem>>, %arg3: memref<128x1xf32, #tpu.memory_space<vmem>>, %arg4: memref<4x128xf32, #tpu.memory_space<vmem>>, %arg5: memref<4x1xf32, #tpu.memory_space<vmem>>, %arg6: memref<1x128xf32, #tpu.memory_space<vmem>>) attributes {dimension_semantics = [#tpu.dimension_semantics<parallel>], iteration_bounds = array<i64: 1>, scalar_prefetch = 0 : i64, scratch_operands = 0 : i64, tpu.core_type = #tpu.core_type<tc>, window_params = [{transform_indices = @transform_0, window_bounds = array<i64: 128, 32>}, {pipeline_mode = #tpu.pipeline_mode<synchronous>, transform_indices = @transform_1, window_bounds = array<i64: 128, 32>}, {pipeline_mode = #tpu.pipeline_mode<synchronous>, transform_indices = @transform_2, window_bounds = array<i64: 128, 1>}, {pipeline_mode = #tpu.pipeline_mode<synchronous>, transform_indices = @transform_3, window_bounds = array<i64: 4, 128>}, {pipeline_mode = #tpu.pipeline_mode<synchronous>, transform_indices = @transform_4, window_bounds = array<i64: 4, 1>}, {transform_indices = @transform_5, window_bounds = array<i64: 1, 128>}]} {
    %c0 = arith.constant 0 : index
    %c0_0 = arith.constant 0 : index
    %0 = vector.load %arg1[%c0, %c0_0] : memref<128x32xf32, #tpu.memory_space<vmem>>, vector<128x32xf32>
    %c0_1 = arith.constant 0 : index
    %c0_2 = arith.constant 0 : index
    %1 = vector.load %arg2[%c0_1, %c0_2] : memref<128x32xf32, #tpu.memory_space<vmem>>, vector<128x32xf32>
    %cst = arith.constant dense<0.000000e+00> : vector<128x128xf32>
    %2 = tpu.matmul %1, %0, %cst {dimension_numbers = #tpu.dot_dimension_numbers<[1], [1], [0], [0], [0, 0, 1, 0], [], []>} : vector<128x32xf32>, vector<128x32xf32>, vector<128x128xf32> -> vector<128x128xf32>
    %c0_3 = arith.constant 0 : index
    %c0_4 = arith.constant 0 : index
    %3 = vector.load %arg3[%c0_3, %c0_4] : memref<128x1xf32, #tpu.memory_space<vmem>>, vector<128x1xf32>
    %4 = vector.broadcast %3 : vector<128x1xf32> to vector<128x128xf32>
    %5 = arith.subf %2, %4 : vector<128x128xf32>
    %6 = arith.mulf %5, %5 : vector<128x128xf32>
    %c0_5 = arith.constant 0 : index
    %c0_6 = arith.constant 0 : index
    %7 = vector.load %arg4[%c0_5, %c0_6] : memref<4x128xf32, #tpu.memory_space<vmem>>, vector<4x128xf32>
    %cst_7 = arith.constant dense<0.000000e+00> : vector<4x128xf32>
    %8 = tpu.matmul %7, %6, %cst_7 {dimension_numbers = #tpu.dot_dimension_numbers<[1], [0], [0], [1], [0, 0, 1, 1], [], []>} : vector<4x128xf32>, vector<128x128xf32>, vector<4x128xf32> -> vector<4x128xf32>
    %c0_8 = arith.constant 0 : index
    %c0_9 = arith.constant 0 : index
    %9 = vector.load %arg5[%c0_8, %c0_9] : memref<4x1xf32, #tpu.memory_space<vmem>>, vector<4x1xf32>
    %10 = vector.broadcast %9 : vector<4x1xf32> to vector<4x128xf32>
    %11 = arith.addf %8, %10 : vector<4x128xf32>
    %cst_10 = arith.constant dense<0xFF800000> : vector<128xf32>
    %12 = vector.multi_reduction <maximumf>, %11, %cst_10 [0] : vector<4x128xf32> to vector<128xf32>
    %13 = vector.shape_cast %12 : vector<128xf32> to vector<1x128xf32>
    %14 = vector.broadcast %13 : vector<1x128xf32> to vector<4x128xf32>
    %15 = arith.subf %11, %14 : vector<4x128xf32>
    %16 = math.exp %15 : vector<4x128xf32>
    %cst_11 = arith.constant dense<0.000000e+00> : vector<128xf32>
    %17 = vector.multi_reduction <add>, %16, %cst_11 [0] : vector<4x128xf32> to vector<128xf32>
    %18 = vector.shape_cast %17 : vector<128xf32> to vector<1x128xf32>
    %19 = math.log %18 : vector<1x128xf32>
    %20 = arith.addf %13, %19 : vector<1x128xf32>
    %cst_12 = arith.constant 0.000000e+00 : f32
    %21 = vector.broadcast %cst_12 : f32 to vector<1x128xf32>
    %22 = arith.subf %21, %20 : vector<1x128xf32>
    %c0_13 = arith.constant 0 : index
    %c0_14 = arith.constant 0 : index
    %23 = vector.load %arg6[%c0_13, %c0_14] : memref<1x128xf32, #tpu.memory_space<vmem>>, vector<1x128xf32>
    tpu.vector_store %arg6[%c0_13, %c0_14], %22 {strides = array<i32>} : memref<1x128xf32, #tpu.memory_space<vmem>>, vector<1x128xf32>,
    return
  }
  func.func @transform_0(%arg0: i32) -> (i32, i32) {
    %c0_i32 = arith.constant 0 : i32
    %c0_i32_0 = arith.constant 0 : i32
    return %arg0, %c0_i32 : i32, i32
  }
  func.func @transform_1(%arg0: i32) -> (i32, i32) {
    %c0_i32 = arith.constant 0 : i32
    %c0_i32_0 = arith.constant 0 : i32
    %c0_i32_1 = arith.constant 0 : i32
    return %c0_i32, %c0_i32_0 : i32, i32
  }
  func.func @transform_2(%arg0: i32) -> (i32, i32) {
    %c0_i32 = arith.constant 0 : i32
    %c0_i32_0 = arith.constant 0 : i32
    %c0_i32_1 = arith.constant 0 : i32
    return %c0_i32, %c0_i32_0 : i32, i32
  }
  func.func @transform_3(%arg0: i32) -> (i32, i32) {
    %c0_i32 = arith.constant 0 : i32
    %c0_i32_0 = arith.constant 0 : i32
    %c0_i32_1 = arith.constant 0 : i32
    return %c0_i32, %c0_i32_0 : i32, i32
  }
  func.func @transform_4(%arg0: i32) -> (i32, i32) {
    %c0_i32 = arith.constant 0 : i32
    %c0_i32_0 = arith.constant 0 : i32
    %c0_i32_1 = arith.constant 0 : i32
    return %c0_i32, %c0_i32_0 : i32, i32
  }
  func.func @transform_5(%arg0: i32) -> (i32, i32) {
    %c0_i32 = arith.constant 0 : i32
    %c0_i32_0 = arith.constant 0 : i32
    return %c0_i32, %arg0 : i32, i32
  }
}

</mosaic_0001>

<llo_original>
// kernel: tpu_custom_call.1
$region0: #{tpu_custom_call.1}
  #allocation0 [shape = 'u32[]', space=smem, size = 0x4, offset = 0x4, fixed_abs, tag = 'smem constant byte address 0x4 - core index']
  #allocation1 [shape = 'u32[144,128]{1,0:T(1,128)}', space=vmem, size = 0x12000, scoped, tag = 'internal scratch']
  %s0 = inlined_call_operand.vmem [shape: f32[128,32], index: 0, kind: input, shape index: {}]
  %s1 = inlined_call_operand.vmem [shape: f32[128,32], index: 1, kind: input, shape index: {}]
  %s2 = inlined_call_operand.vmem [shape: f32[128,1], index: 2, kind: input, shape index: {}]
  %s3 = inlined_call_operand.vmem [shape: f32[4,128], index: 3, kind: input, shape index: {}]
  %s4 = inlined_call_operand.vmem [shape: f32[4,1], index: 4, kind: input, shape index: {}]
  %s5 = inlined_call_operand.hbm [shape: f32[1,128], index: 5, kind: output, shape index: {}]
  %s6 = sld [smem:[#allocation0]]
  $region30: #{tpu_custom_call.1} parent=0
    _
  %s8 = ssub.s32 1, %s6
  %s9 = scalar_select 0, %s8, %s6
  $region1: #{tpu_custom_call.1} parent=0
    #allocation2 [shape = 'u8[512]{0}', space=vmem, size = 0x400, scoped, tag = 'output window, operand 0, single buffered']
    #allocation3 [shape = 's32[1]{0}', space=sflag, size = 0x4, scoped, tag = 'scoped memory for tpu_custom_call.1']
    %10 = vsyncpa [#allocation3], 0
    // Predicated region
    $region2: #{tpu_custom_call.1} parent=1 // pred_check
      _
    $region3: #{tpu_custom_call.1} parent=1 // pred_check_branch
      %12 = sbr.rel (0) target = $region5
    $region4: #{tpu_custom_call.1} parent=1 // pred_region
      _
    $region5: #{tpu_custom_call.1} parent=1 // pred_fallthru
      _
    // Predicated region
    $region6: #{tpu_custom_call.1} parent=1 // pred_check
      _
    $region7: #{tpu_custom_call.1} parent=1 // pred_check_branch
      %14 = sbr.rel (0) target = $region9
    $region8: #{tpu_custom_call.1} parent=1 // pred_region
      _
    $region9: #{tpu_custom_call.1} parent=1 // pred_fallthru
      _
    // Predicated region
    $region10: #{tpu_custom_call.1} parent=1 // pred_check
      _
    $region11: #{tpu_custom_call.1} parent=1 // pred_check_branch
      %16 = sbr.rel (0) target = $region13
    $region12: #{tpu_custom_call.1} parent=1 // pred_region
      _
    $region13: #{tpu_custom_call.1} parent=1 // pred_fallthru
      _
    // Predicated region
    $region14: #{tpu_custom_call.1} parent=1 // pred_check
      _
    $region15: #{tpu_custom_call.1} parent=1 // pred_check_branch
      %18 = sbr.rel (0) target = $region17
    $region16: #{tpu_custom_call.1} parent=1 // pred_region
      _
    $region17: #{tpu_custom_call.1} parent=1 // pred_fallthru
      _
    // Predicated region
    $region18: #{tpu_custom_call.1} parent=1 // pred_check
      _
    $region19: #{tpu_custom_call.1} parent=1 // pred_check_branch
      %20 = sbr.rel (0) target = $region21
    $region20: #{tpu_custom_call.1} parent=1 // pred_region
      _
    $region21: #{tpu_custom_call.1} parent=1 // pred_fallthru
      _
    %v21 = vld [vmem:[%s0] sm:$0xff]
    %v22 = vld [vmem:[%s0 + $0x8] sm:$0xff]
    %v23 = vld [vmem:[%s0 + $0x10] sm:$0xff]
    %v24 = vld [vmem:[%s0 + $0x18] sm:$0xff]
    %v25 = vld [vmem:[%s0 + $0x20] sm:$0xff]
    %v26 = vld [vmem:[%s0 + $0x28] sm:$0xff]
    %v27 = vld [vmem:[%s0 + $0x30] sm:$0xff]
    %v28 = vld [vmem:[%s0 + $0x38] sm:$0xff]
    %v29 = vld [vmem:[%s0 + $0x40] sm:$0xff]
    %v30 = vld [vmem:[%s0 + $0x48] sm:$0xff]
    %v31 = vld [vmem:[%s0 + $0x50] sm:$0xff]
    %v32 = vld [vmem:[%s0 + $0x58] sm:$0xff]
    %v33 = vld [vmem:[%s0 + $0x60] sm:$0xff]
    %v34 = vld [vmem:[%s0 + $0x68] sm:$0xff]
    %v35 = vld [vmem:[%s0 + $0x70] sm:$0xff]
    %v36 = vld [vmem:[%s0 + $0x78] sm:$0xff]
    %v37 = vld [vmem:[%s1] sm:$0xff]
    %v38 = vld [vmem:[%s1 + $0x8] sm:$0xff]
    %v39 = vld [vmem:[%s1 + $0x10] sm:$0xff]
    %v40 = vld [vmem:[%s1 + $0x18] sm:$0xff]
    %v41 = vld [vmem:[%s1 + $0x20] sm:$0xff]
    %v42 = vld [vmem:[%s1 + $0x28] sm:$0xff]
    %v43 = vld [vmem:[%s1 + $0x30] sm:$0xff]
    %v44 = vld [vmem:[%s1 + $0x38] sm:$0xff]
    %v45 = vld [vmem:[%s1 + $0x40] sm:$0xff]
    %v46 = vld [vmem:[%s1 + $0x48] sm:$0xff]
    %v47 = vld [vmem:[%s1 + $0x50] sm:$0xff]
    %v48 = vld [vmem:[%s1 + $0x58] sm:$0xff]
    %v49 = vld [vmem:[%s1 + $0x60] sm:$0xff]
    %v50 = vld [vmem:[%s1 + $0x68] sm:$0xff]
    %v51 = vld [vmem:[%s1 + $0x70] sm:$0xff]
    %v52 = vld [vmem:[%s1 + $0x78] sm:$0xff]
    %vm53 = vcmask 261120
    %v55 = vsel %vm53, %v37, 0
    %v58 = vsel %vm53, %v38, 0
    %v61 = vsel %vm53, %v39, 0
    %v64 = vsel %vm53, %v40, 0
    %v67 = vsel %vm53, %v41, 0
    %v70 = vsel %vm53, %v42, 0
    %v73 = vsel %vm53, %v43, 0
    %v76 = vsel %vm53, %v44, 0
    %v79 = vsel %vm53, %v45, 0
    %v82 = vsel %vm53, %v46, 0
    %v85 = vsel %vm53, %v47, 0
    %v88 = vsel %vm53, %v48, 0
    %v91 = vsel %vm53, %v49, 0
    %v94 = vsel %vm53, %v50, 0
    %v97 = vsel %vm53, %v51, 0
    %v100 = vsel %vm53, %v52, 0
    %v103 = vsel %vm53, %v21, 0
    %v106 = vsel %vm53, %v22, 0
    %v109 = vsel %vm53, %v23, 0
    %v112 = vsel %vm53, %v24, 0
    %v115 = vsel %vm53, %v25, 0
    %v118 = vsel %vm53, %v26, 0
    %v121 = vsel %vm53, %v27, 0
    %v124 = vsel %vm53, %v28, 0
    %v127 = vsel %vm53, %v29, 0
    %v130 = vsel %vm53, %v30, 0
    %v133 = vsel %vm53, %v31, 0
    %v136 = vsel %vm53, %v32, 0
    %v139 = vsel %vm53, %v33, 0
    %v142 = vsel %vm53, %v34, 0
    %v145 = vsel %vm53, %v35, 0
    %v148 = vsel %vm53, %v36, 0
    %150 = vmatprep.subr.mxu0 0.0
    %151 = vmatpush1.xpose.msra.mxu0 %v103
    %152 = vmatprep.subr.mxu0 0.0
    %153 = vmatpush1.xpose.msra.mxu0 %v106
    %154 = vmatprep.subr.mxu0 0.0
    %155 = vmatpush1.xpose.msra.mxu0 %v109
    %156 = vmatprep.subr.mxu0 0.0
    %157 = vmatpush1.xpose.msra.mxu0 %v112
    %158 = vmatprep.subr.mxu0 0.0
    %159 = vmatpush1.xpose.msra.mxu0 %v115
    %160 = vmatprep.subr.mxu0 0.0
    %161 = vmatpush1.xpose.msra.mxu0 %v118
    %162 = vmatprep.subr.mxu0 0.0
    %163 = vmatpush1.xpose.msra.mxu0 %v121
    %164 = vmatprep.subr.mxu0 0.0
    %165 = vmatpush1.xpose.msra.mxu0 %v124
    %166 = vmatprep.subr.mxu0 0.0
    %167 = vmatpush1.xpose.msra.mxu0 %v127
    %168 = vmatprep.subr.mxu0 0.0
    %169 = vmatpush1.xpose.msra.mxu0 %v130
    %170 = vmatprep.subr.mxu0 0.0
    %171 = vmatpush1.xpose.msra.mxu0 %v133
    %172 = vmatprep.subr.mxu0 0.0
    %173 = vmatpush1.xpose.msra.mxu0 %v136
    %174 = vmatprep.subr.mxu0 0.0
    %175 = vmatpush1.xpose.msra.mxu0 %v139
    %176 = vmatprep.subr.mxu0 0.0
    %177 = vmatpush1.xpose.msra.mxu0 %v142
    %178 = vmatprep.subr.mxu0 0.0
    %179 = vmatpush1.xpose.msra.mxu0 %v145
    %180 = vmatprep.subr.mxu0 0.0
    %181 = vmatpush1.xpose.msra.mxu0 %v148
    %182 = vmatprep.subr.mxu0 0.0
    %183 = vmatpush1.xpose.msra.mxu0 0.0
    %184 = vmatprep.subr.mxu0 0.0
    %185 = vmatpush1.xpose.msra.mxu0 0.0
    %186 = vmatprep.subr.mxu0 0.0
    %187 = vmatpush1.xpose.msra.mxu0 0.0
    %188 = vmatprep.subr.mxu0 0.0
    %189 = vmatpush1.xpose.msra.mxu0 0.0
    %190 = vmatprep.subr.mxu0 0.0
    %191 = vmatpush1.xpose.msra.mxu0 0.0
    %192 = vmatprep.subr.mxu0 0.0
    %193 = vmatpush1.xpose.msra.mxu0 0.0
    %194 = vmatprep.subr.mxu0 0.0
    %195 = vmatpush1.xpose.msra.mxu0 0.0
    %196 = vmatprep.subr.mxu0 0.0
    %197 = vmatpush1.xpose.msra.mxu0 0.0
    %198 = vmatprep.subr.mxu0 0.0
    %199 = vmatpush1.xpose.msra.mxu0 0.0
    %200 = vmatprep.subr.mxu0 0.0
    %201 = vmatpush1.xpose.msra.mxu0 0.0
    %202 = vmatprep.subr.mxu0 0.0
    %203 = vmatpush1.xpose.msra.mxu0 0.0
    %204 = vmatprep.subr.mxu0 0.0
    %205 = vmatpush1.xpose.msra.mxu0 0.0
    %206 = vmatprep.subr.mxu0 0.0
    %207 = vmatpush1.xpose.msra.mxu0 0.0
    %208 = vmatprep.subr.mxu0 0.0
    %209 = vmatpush1.xpose.msra.mxu0 0.0
    %210 = vmatprep.subr.mxu0 0.0
    %211 = vmatpush1.xpose.msra.mxu0 0.0
    %212 = vmatprep.subr.mxu0 0.0
    %213 = vmatpush1.xpose.msra.mxu0 0.0
    %214 = vmatprep.mubr.f32.mxu0 0.0
    %215 = vmatmul.mubr.f32.gmra.mrb[0].mxu0 %v55
    %v216 = vpop.f32.mrb[0].mxu0
    %v217 = vadd.f32 0.0, %v216
    %v218 = vpop.f32.mrb[0].mxu0
    %219 = vmatprep.mubr.f32.mxu0 0.0
    %220 = vmatmul.mubr.f32.gmra.mrb[0].mxu0 %v58
    %v221 = vpop.f32.mrb[0].mxu0
    %v222 = vadd.f32 0.0, %v221
    %v223 = vpop.f32.mrb[0].mxu0
    %224 = vmatprep.mubr.f32.mxu0 0.0
    %225 = vmatmul.mubr.f32.gmra.mrb[0].mxu0 %v61
    %v226 = vpop.f32.mrb[0].mxu0
    %v227 = vadd.f32 0.0, %v226
    %v228 = vpop.f32.mrb[0].mxu0
    %229 = vmatprep.mubr.f32.mxu0 0.0
    %230 = vmatmul.mubr.f32.gmra.mrb[0].mxu0 %v64
    %v231 = vpop.f32.mrb[0].mxu0
    %v232 = vadd.f32 0.0, %v231
    %v233 = vpop.f32.mrb[0].mxu0
    %234 = vmatprep.mubr.f32.mxu0 0.0
    %235 = vmatmul.mubr.f32.gmra.mrb[0].mxu0 %v67
    %v236 = vpop.f32.mrb[0].mxu0
    %v237 = vadd.f32 0.0, %v236
    %v238 = vpop.f32.mrb[0].mxu0
    %239 = vmatprep.mubr.f32.mxu0 0.0
    %240 = vmatmul.mubr.f32.gmra.mrb[0].mxu0 %v70
    %v241 = vpop.f32.mrb[0].mxu0
    %v242 = vadd.f32 0.0, %v241
    %v243 = vpop.f32.mrb[0].mxu0
    %244 = vmatprep.mubr.f32.mxu0 0.0
    %245 = vmatmul.mubr.f32.gmra.mrb[0].mxu0 %v73
    %v246 = vpop.f32.mrb[0].mxu0
    %v247 = vadd.f32 0.0, %v246
    %v248 = vpop.f32.mrb[0].mxu0
    %249 = vmatprep.mubr.f32.mxu0 0.0
    %250 = vmatmul.mubr.f32.gmra.mrb[0].mxu0 %v76
    %v251 = vpop.f32.mrb[0].mxu0
    %v252 = vadd.f32 0.0, %v251
    %v253 = vpop.f32.mrb[0].mxu0
    %254 = vmatprep.mubr.f32.mxu0 0.0
    %255 = vmatmul.mubr.f32.gmra.mrb[0].mxu0 %v79
    %v256 = vpop.f32.mrb[0].mxu0
    %v257 = vadd.f32 0.0, %v256
    %v258 = vpop.f32.mrb[0].mxu0
    %259 = vmatprep.mubr.f32.mxu0 0.0
    %260 = vmatmul.mubr.f32.gmra.mrb[0].mxu0 %v82
    %v261 = vpop.f32.mrb[0].mxu0
    %v262 = vadd.f32 0.0, %v261
    %v263 = vpop.f32.mrb[0].mxu0
    %264 = vmatprep.mubr.f32.mxu0 0.0
    %265 = vmatmul.mubr.f32.gmra.mrb[0].mxu0 %v85
    %v266 = vpop.f32.mrb[0].mxu0
    %v267 = vadd.f32 0.0, %v266
    %v268 = vpop.f32.mrb[0].mxu0
    %269 = vmatprep.mubr.f32.mxu0 0.0
    %270 = vmatmul.mubr.f32.gmra.mrb[0].mxu0 %v88
    %v271 = vpop.f32.mrb[0].mxu0
    %v272 = vadd.f32 0.0, %v271
    %v273 = vpop.f32.mrb[0].mxu0
    %274 = vmatprep.mubr.f32.mxu0 0.0
    %275 = vmatmul.mubr.f32.gmra.mrb[0].mxu0 %v91
    %v276 = vpop.f32.mrb[0].mxu0
    %v277 = vadd.f32 0.0, %v276
    %v278 = vpop.f32.mrb[0].mxu0
    %279 = vmatprep.mubr.f32.mxu0 0.0
    %280 = vmatmul.mubr.f32.gmra.mrb[0].mxu0 %v94
    %v281 = vpop.f32.mrb[0].mxu0
    %v282 = vadd.f32 0.0, %v281
    %v283 = vpop.f32.mrb[0].mxu0
    %284 = vmatprep.mubr.f32.mxu0 0.0
    %285 = vmatmul.mubr.f32.gmra.mrb[0].mxu0 %v97
    %v286 = vpop.f32.mrb[0].mxu0
    %v287 = vadd.f32 0.0, %v286
    %v288 = vpop.f32.mrb[0].mxu0
    %289 = vmatprep.mubr.f32.mxu0 0.0
    %290 = vmatmul.mubr.f32.gmra.mrb[0].mxu0 %v100
    %v291 = vpop.f32.mrb[0].mxu0
    %v292 = vadd.f32 0.0, %v291
    %v293 = vpop.f32.mrb[0].mxu0
    %294 = vdwg.mxu0
    %v295 = vld [vmem:[%s2] sm:$0xff]
    %v296 = vld [vmem:[%s2 + $0x8] sm:$0xff]
    %v297 = vld [vmem:[%s2 + $0x10] sm:$0xff]
    %v298 = vld [vmem:[%s2 + $0x18] sm:$0xff]
    %v299 = vld [vmem:[%s2 + $0x20] sm:$0xff]
    %v300 = vld [vmem:[%s2 + $0x28] sm:$0xff]
    %v301 = vld [vmem:[%s2 + $0x30] sm:$0xff]
    %v302 = vld [vmem:[%s2 + $0x38] sm:$0xff]
    %v303 = vld [vmem:[%s2 + $0x40] sm:$0xff]
    %v304 = vld [vmem:[%s2 + $0x48] sm:$0xff]
    %v305 = vld [vmem:[%s2 + $0x50] sm:$0xff]
    %v306 = vld [vmem:[%s2 + $0x58] sm:$0xff]
    %v307 = vld [vmem:[%s2 + $0x60] sm:$0xff]
    %v308 = vld [vmem:[%s2 + $0x68] sm:$0xff]
    %v309 = vld [vmem:[%s2 + $0x70] sm:$0xff]
    %v310 = vld [vmem:[%s2 + $0x78] sm:$0xff]
    %312 = vset.pattern.permute.xlu0 0
    %313 = vperm.xlu0 %312, %v295
    %v314 = vpop.permute.xlu0 %313
    %317 = vset.pattern.permute.xlu0 0
    %318 = vperm.xlu0 %317, %v296
    %v319 = vpop.permute.xlu0 %318
    %322 = vset.pattern.permute.xlu0 0
    %323 = vperm.xlu0 %322, %v297
    %v324 = vpop.permute.xlu0 %323
    %327 = vset.pattern.permute.xlu0 0
    %328 = vperm.xlu0 %327, %v298
    %v329 = vpop.permute.xlu0 %328
    %332 = vset.pattern.permute.xlu0 0
    %333 = vperm.xlu0 %332, %v299
    %v334 = vpop.permute.xlu0 %333
    %337 = vset.pattern.permute.xlu0 0
    %338 = vperm.xlu0 %337, %v300
    %v339 = vpop.permute.xlu0 %338
    %342 = vset.pattern.permute.xlu0 0
    %343 = vperm.xlu0 %342, %v301
    %v344 = vpop.permute.xlu0 %343
    %347 = vset.pattern.permute.xlu0 0
    %348 = vperm.xlu0 %347, %v302
    %v349 = vpop.permute.xlu0 %348
    %352 = vset.pattern.permute.xlu0 0
    %353 = vperm.xlu0 %352, %v303
    %v354 = vpop.permute.xlu0 %353
    %357 = vset.pattern.permute.xlu0 0
    %358 = vperm.xlu0 %357, %v304
    %v359 = vpop.permute.xlu0 %358
    %362 = vset.pattern.permute.xlu0 0
    %363 = vperm.xlu0 %362, %v305
    %v364 = vpop.permute.xlu0 %363
    %367 = vset.pattern.permute.xlu0 0
    %368 = vperm.xlu0 %367, %v306
    %v369 = vpop.permute.xlu0 %368
    %372 = vset.pattern.permute.xlu0 0
    %373 = vperm.xlu0 %372, %v307
    %v374 = vpop.permute.xlu0 %373
    %377 = vset.pattern.permute.xlu0 0
    %378 = vperm.xlu0 %377, %v308
    %v379 = vpop.permute.xlu0 %378
    %382 = vset.pattern.permute.xlu0 0
    %383 = vperm.xlu0 %382, %v309
    %v384 = vpop.permute.xlu0 %383
    %387 = vset.pattern.permute.xlu0 0
    %388 = vperm.xlu0 %387, %v310
    %v389 = vpop.permute.xlu0 %388
    %v391 = vsub.f32 %v217, %v314
    %v392 = vsub.f32 %v222, %v319
    %v393 = vsub.f32 %v227, %v324
    %v394 = vsub.f32 %v232, %v329
    %v395 = vsub.f32 %v237, %v334
    %v396 = vsub.f32 %v242, %v339
    %v397 = vsub.f32 %v247, %v344
    %v398 = vsub.f32 %v252, %v349
    %v399 = vsub.f32 %v257, %v354
    %v400 = vsub.f32 %v262, %v359
    %v401 = vsub.f32 %v267, %v364
    %v402 = vsub.f32 %v272, %v369
    %v403 = vsub.f32 %v277, %v374
    %v404 = vsub.f32 %v282, %v379
    %v405 = vsub.f32 %v287, %v384
    %v406 = vsub.f32 %v292, %v389
    %v407 = vmul.f32 %v391, %v391
    %v408 = vmul.f32 %v392, %v392
    %v409 = vmul.f32 %v393, %v393
    %v410 = vmul.f32 %v394, %v394
    %v411 = vmul.f32 %v395, %v395
    %v412 = vmul.f32 %v396, %v396
    %v413 = vmul.f32 %v397, %v397
    %v414 = vmul.f32 %v398, %v398
    %v415 = vmul.f32 %v399, %v399
    %v416 = vmul.f32 %v400, %v400
    %v417 = vmul.f32 %v401, %v401
    %v418 = vmul.f32 %v402, %v402
    %v419 = vmul.f32 %v403, %v403
    %v420 = vmul.f32 %v404, %v404
    %v421 = vmul.f32 %v405, %v405
    %v422 = vmul.f32 %v406, %v406
    %v423 = vld [vmem:[%s3] sm:$0xf]
    %v424 = vld [vmem:[%s4] sm:$0xf]
    %426 = vset.pattern.permute.xlu0 0
    %427 = vperm.xlu0 %426, %v424
    %v428 = vpop.permute.xlu0 %427
    %430 = vmatprep.subr.mxu0 0.0
    %431 = vmatpush1.msra.mxu0 %v407
    %432 = vmatprep.subr.mxu0 0.0
    %433 = vmatpush1.msra.mxu0 %v408
    %434 = vmatprep.subr.mxu0 0.0
    %435 = vmatpush1.msra.mxu0 %v409
    %436 = vmatprep.subr.mxu0 0.0
    %437 = vmatpush1.msra.mxu0 %v410
    %438 = vmatprep.subr.mxu0 0.0
    %439 = vmatpush1.msra.mxu0 %v411
    %440 = vmatprep.subr.mxu0 0.0
    %441 = vmatpush1.msra.mxu0 %v412
    %442 = vmatprep.subr.mxu0 0.0
    %443 = vmatpush1.msra.mxu0 %v413
    %444 = vmatprep.subr.mxu0 0.0
    %445 = vmatpush1.msra.mxu0 %v414
    %446 = vmatprep.subr.mxu0 0.0
    %447 = vmatpush1.msra.mxu0 %v415
    %448 = vmatprep.subr.mxu0 0.0
    %449 = vmatpush1.msra.mxu0 %v416
    %450 = vmatprep.subr.mxu0 0.0
    %451 = vmatpush1.msra.mxu0 %v417
    %452 = vmatprep.subr.mxu0 0.0
    %453 = vmatpush1.msra.mxu0 %v418
    %454 = vmatprep.subr.mxu0 0.0
    %455 = vmatpush1.msra.mxu0 %v419
    %456 = vmatprep.subr.mxu0 0.0
    %457 = vmatpush1.msra.mxu0 %v420
    %458 = vmatprep.subr.mxu0 0.0
    %459 = vmatpush1.msra.mxu0 %v421
    %460 = vmatprep.subr.mxu0 0.0
    %461 = vmatpush1.msra.mxu0 %v422
    %462 = vmatprep.subr.mxu0 0.0
    %463 = vmatpush1.msra.mxu0 0.0
    %464 = vmatprep.subr.mxu0 0.0
    %465 = vmatpush1.msra.mxu0 0.0
    %466 = vmatprep.subr.mxu0 0.0
    %467 = vmatpush1.msra.mxu0 0.0
    %468 = vmatprep.subr.mxu0 0.0
    %469 = vmatpush1.msra.mxu0 0.0
    %470 = vmatprep.subr.mxu0 0.0
    %471 = vmatpush1.msra.mxu0 0.0
    %472 = vmatprep.subr.mxu0 0.0
    %473 = vmatpush1.msra.mxu0 0.0
    %474 = vmatprep.subr.mxu0 0.0
    %475 = vmatpush1.msra.mxu0 0.0
    %476 = vmatprep.subr.mxu0 0.0
    %477 = vmatpush1.msra.mxu0 0.0
    %478 = vmatprep.subr.mxu0 0.0
    %479 = vmatpush1.msra.mxu0 0.0
    %480 = vmatprep.subr.mxu0 0.0
    %481 = vmatpush1.msra.mxu0 0.0
    %482 = vmatprep.subr.mxu0 0.0
    %483 = vmatpush1.msra.mxu0 0.0
    %484 = vmatprep.subr.mxu0 0.0
    %485 = vmatpush1.msra.mxu0 0.0
    %486 = vmatprep.subr.mxu0 0.0
    %487 = vmatpush1.msra.mxu0 0.0
    %488 = vmatprep.subr.mxu0 0.0
    %489 = vmatpush1.msra.mxu0 0.0
    %490 = vmatprep.subr.mxu0 0.0
    %491 = vmatpush1.msra.mxu0 0.0
    %492 = vmatprep.subr.mxu0 0.0
    %493 = vmatpush1.msra.mxu0 0.0
    %494 = vmatprep.mubr.f32.mxu0 0.0
    %495 = vmatmul.mubr.f32.gmra.mrb[0].mxu0 %v423
    %v496 = vpop.f32.mrb[0].mxu0
    %v497 = vadd.f32 %v428, %v496
    %v498 = vpop.f32.mrb[0].mxu0
    %499 = vdwg.mxu0
    %vm500 = vcmask 1043456
    %v501 = vsel %vm500, %v497, -inf
    %v502 = vrot.slane %v501, 4
    %v503 = vmax.f32 %v501, %v502
    %v504 = vrot.slane %v503, 2
    %v505 = vmax.f32 %v503, %v504
    %v506 = vrot.slane %v505, 1
    %v507 = vmax.f32 %v505, %v506
    %v508 = vsub.f32 %v497, %v507
    %v509 = vmul.f32 %v508, 1.442695
    %v510 = vpow.pop %v509
    %v511 = vsel %vm500, %v510, 0.0
    %v512 = vrot.slane %v511, 4
    %v513 = vadd.f32 %v511, %v512
    %v514 = vrot.slane %v513, 2
    %v515 = vadd.f32 %v513, %v514
    %v516 = vrot.slane %v515, 1
    %v517 = vadd.f32 %v515, %v516
    %v518 = vlog2.pop %v517
    %v519 = vmul.f32 %v518, 0.6931472
    %v520 = vadd.f32 %v507, %v519
    %v521 = vsub.f32 0.0, %v520
    %522 = vst [vmem:[#allocation2] sm:$0x1] %v521
    // Predicated region
    $region22: #{tpu_custom_call.1} parent=1 // pred_check
      _
    $region23: #{tpu_custom_call.1} parent=1 // pred_check_branch
      %524 = sbr.rel (0) target = $region25
    $region24: #{tpu_custom_call.1} parent=1 // pred_region
      %s526 = ssub.s32 16, 16
      %527 = vsyncadd [#allocation3], %s526
      %s529 = sshll.u32 [#allocation2], 4
      %s530 = int_to_ptr.vmem [resolvable:$true] %s529
      %532 = dma.vmem_to_hbm [thread:$0]  %s530, 16, %s5, [#allocation3]
    $region25: #{tpu_custom_call.1} parent=1 // pred_fallthru
      _
    // Predicated region
    $region26: #{tpu_custom_call.1} parent=1 // pred_check
      _
    $region27: #{tpu_custom_call.1} parent=1 // pred_check_branch
      %534 = sbr.rel (0) target = $region29
    $region28: #{tpu_custom_call.1} parent=1 // pred_region
      %535 = dma.done [#allocation3], 16
    $region29: #{tpu_custom_call.1} parent=1 // pred_fallthru
      _
    %536 = vsyncpa [#allocation3], 1

</llo_original>
